<compile_context>
chip_gen: v7x
topology: tpu7x:2x2x1
jax: 0.10.0
libtpu: 0.0.40
codegen_flags: <defaults>
</compile_context>

<pallas_src>
import functools

import jax
import jax.numpy as jnp
import numpy as np
from jax.experimental import pallas as pl
from jax.experimental.pallas import tpu as pltpu

LN_EPS = 1e-5  # PyTorch nn.LayerNorm default


def _dynamic_mlp_a_kernel(loc_ref, img_ref, w2_ref, gamma_ref, beta_ref, out_ref,
                          *, loc_planes, inplanes):
    """Fused dynamic-weight matmul + LayerNorm + ReLU for one row tile."""
    loc = loc_ref[...]                      # (TN, L)  storage dtype
    img = img_ref[...]                      # (TN, I)

    # Decomposed accumulated MXU matmuls — replaces the old 9-piece lane-minor
    # concatenate (which forced XLU relayouts + register spills).  Each W2 slice
    # is a static, sublane-aligned (I, P) window of the resident folded weight.
    acc = jnp.dot(img, w2_ref[loc_planes * inplanes:, :],
                  preferred_element_type=jnp.float32)            # bias block, (TN, P) f32
    for l in range(loc_planes):                                  # L is small & static
        scaled = loc[:, l:l + 1] * img                           # lane-broadcast * VPU mul
        acc = acc + jnp.dot(scaled, w2_ref[l * inplanes:(l + 1) * inplanes, :],
                            preferred_element_type=jnp.float32)

    # LayerNorm(planes) in f32, one-pass statistics: mean and E[x^2] are
    # independent cross-lane reductions (no serial XLU dependency).
    mean = jnp.mean(acc, axis=-1, keepdims=True)
    mean_sq = jnp.mean(acc * acc, axis=-1, keepdims=True)
    var = mean_sq - mean * mean                                  # biased, like torch
    normed = (acc - mean) * jax.lax.rsqrt(var + LN_EPS)
    y = normed * gamma_ref[...].astype(jnp.float32) + beta_ref[...].astype(jnp.float32)

    # ReLU + store.  planes < 128 means lane-masked stores; with the concatenate
    # gone the store slot is not the binding resource at these shapes, so we keep
    # the sample-major layout (an in-kernel (TN,P)->(TN/f, f*P) repack would only
    # trade masked vst for XLU relayout work).
    out_ref[...] = jnp.maximum(y, 0.0).astype(out_ref.dtype)


def _round_up(x, m):
    return ((x + m - 1) // m) * m


def _vmem_cap_bytes():
    # Generation-aware scoped-VMEM ceiling: stay well under v7x's 64 MiB/TC,
    # allow more on v5e/v6e (128 MiB physical).
    try:
        phys = pltpu.get_tpu_info().vmem_capacity_bytes
    except Exception:  # query unavailable -> conservative default, safe everywhere
        return 32 << 20
    return (32 << 20) if phys <= (64 << 20) else (48 << 20)


def dynamic_mlp_a(img_fea, loc_fea, params, *, inplanes, planes, tile_n=1024):
    """img_fea: (N, inplanes), loc_fea: (N, loc_planes) -> (N, planes)."""
    N = img_fea.shape[0]
    loc_planes = loc_fea.shape[1]
    assert img_fea.shape[1] == inplanes

    # Fold Linear weight + bias into one (K, planes) matrix (done once, host side):
    #   W2[l*inplanes + i, p]           = wg[l, i*planes + p]   for l < loc_planes
    #   W2[loc_planes*inplanes + i, p]  = bg[i*planes + p]
    wg3 = params["wg"].reshape(loc_planes, inplanes, planes)
    bg3 = params["bg"].reshape(1, inplanes, planes)
    w2 = jnp.concatenate([wg3, bg3], axis=0).reshape((loc_planes + 1) * inplanes, planes)
    w2 = w2.astype(img_fea.dtype)          # bf16 inputs -> native bf16 MXU operands
    gamma = params["gamma"].reshape(1, planes).astype(jnp.float32)
    beta = params["beta"].reshape(1, planes).astype(jnp.float32)

    # ---- tile sizing -------------------------------------------------------
    itemsize = jnp.dtype(img_fea.dtype).itemsize
    align = 16 if itemsize < 4 else 8       # bf16 packs 2 rows/sublane -> multiple of 16
    tile_n = int(max(align, min(int(tile_n), _round_up(N, align))))
    # v7x has 2 TensorCores: keep the grid at >= 2 steps whenever N allows it so
    # the 'parallel' axis can be sharded across both cores (no-op for v5e/v6e).
    if N >= 2 * align:
        tile_n = min(tile_n, max(align, _round_up(pl.cdiv(N, 2), align)))
    tile_n = _round_up(tile_n, align)
    n_pad = _round_up(N, tile_n)
    if n_pad != N:
        # Zero-padded rows give z=0 -> acc=0 -> finite LN (rsqrt(eps)); sliced off below.
        img_fea = jnp.pad(img_fea, ((0, n_pad - N), (0, 0)))
        loc_fea = jnp.pad(loc_fea, ((0, n_pad - N), (0, 0)))
    grid = (n_pad // tile_n,)

    # ---- VMEM budget -------------------------------------------------------
    K = (loc_planes + 1) * inplanes
    per_step = tile_n * (loc_planes + inplanes + planes) * itemsize       # in/out tiles
    resident = K * planes * itemsize + 2 * planes * 4                     # w2, gamma, beta
    scratch = tile_n * (inplanes + 4 * planes) * 4                        # f32 temporaries
    vmem_limit = int(min(max(3 * (2 * per_step + 2 * resident) + scratch, 16 << 20),
                         _vmem_cap_bytes()))
    # NOTE: w2/gamma/beta are tiny here; single-buffering them (pl.Buffered(1))
    # only matters at production inplanes*planes sizes, so it is left at default.

    kernel = functools.partial(_dynamic_mlp_a_kernel,
                               loc_planes=loc_planes, inplanes=inplanes)

    out = pl.pallas_call(
        kernel,
        out_shape=jax.ShapeDtypeStruct((n_pad, planes), img_fea.dtype),
        grid_spec=pltpu.PrefetchScalarGridSpec(
            num_scalar_prefetch=0,
            grid=grid,
            in_specs=[
                pl.BlockSpec((tile_n, loc_planes), lambda i: (i, 0)),
                pl.BlockSpec((tile_n, inplanes), lambda i: (i, 0)),
                pl.BlockSpec((K, planes), lambda i: (0, 0)),
                pl.BlockSpec((1, planes), lambda i: (0, 0)),
                pl.BlockSpec((1, planes), lambda i: (0, 0)),
            ],
            out_specs=pl.BlockSpec((tile_n, planes), lambda i: (i, 0)),
        ),
        compiler_params=pltpu.CompilerParams(
            dimension_semantics=("parallel",),
            vmem_limit_bytes=vmem_limit,
        ),
    )(loc_fea, img_fea, w2, gamma, beta)

    return out[:N] if n_pad != N else out


def reference(img_fea, loc_fea, params, *, inplanes, planes):
    """Pure-JAX reference mirroring the PyTorch forward (f32)."""
    img_fea = img_fea.astype(jnp.float32)
    loc_fea = loc_fea.astype(jnp.float32)
    w = loc_fea @ params["wg"] + params["bg"]                # (N, inplanes*planes)
    w = w.reshape(-1, inplanes, planes)
    y = jnp.einsum("ni,nip->np", img_fea, w)                 # bmm with (N,1,inplanes)
    mean = y.mean(-1, keepdims=True)
    var = ((y - mean) ** 2).mean(-1, keepdims=True)
    y = (y - mean) / jnp.sqrt(var + LN_EPS)
    y = y * params["gamma"] + params["beta"]
    return jnp.maximum(y, 0.0)


if __name__ == "__main__":
    # Small, module-consistent shapes.
    N = 16          # number of samples (flattened locations)
    inplanes = 16   # img_fea channels
    planes = 32     # output channels (LayerNorm dim)
    loc_planes = 8  # loc_fea channels

    key = jax.random.PRNGKey(0)
    k1, k2, k3, k4, k5, k6 = jax.random.split(key, 6)

    img_fea = jax.random.normal(k1, (N, inplanes), dtype=jnp.float32)
    loc_fea = jax.random.normal(k2, (N, loc_planes), dtype=jnp.float32)

    # Deterministic synthetic parameters (shapes per nn.Linear / nn.LayerNorm).
    params = {
        "wg": jax.random.normal(k3, (loc_planes, inplanes * planes), dtype=jnp.float32)
              * (1.0 / np.sqrt(loc_planes)),
        "bg": jax.random.normal(k4, (inplanes * planes,), dtype=jnp.float32) * 0.1,
        "gamma": 1.0 + 0.1 * jax.random.normal(k5, (planes,), dtype=jnp.float32),
        "beta": 0.1 * jax.random.normal(k6, (planes,), dtype=jnp.float32),
    }

    # f32, even N
    out = dynamic_mlp_a(img_fea, loc_fea, params, inplanes=inplanes, planes=planes)
    out = jax.block_until_ready(out)
    ref = jax.block_until_ready(
        reference(img_fea, loc_fea, params, inplanes=inplanes, planes=planes))
    np.testing.assert_allclose(np.asarray(out), np.asarray(ref), rtol=1e-4, atol=1e-5)

    # Ragged-N path: exercises tile clamping + zero-padding + output slice-back.
    N2 = 37
    img2 = jax.random.normal(k5, (N2, inplanes), dtype=jnp.float32)
    loc2 = jax.random.normal(k6, (N2, loc_planes), dtype=jnp.float32)
    out2 = jax.block_until_ready(
        dynamic_mlp_a(img2, loc2, params, inplanes=inplanes, planes=planes))
    ref2 = reference(img2, loc2, params, inplanes=inplanes, planes=planes)
    np.testing.assert_allclose(np.asarray(out2), np.asarray(ref2), rtol=1e-4, atol=1e-5)

    # bf16 path: exercises 16-row alignment, 2-step grid and bf16 MXU operands.
    # (bf16 rounding of inputs/weights -> loose tolerance, f32 accumulate + f32 LN.)
    N3 = 53
    img3 = jax.random.normal(k3, (N3, inplanes), dtype=jnp.float32).astype(jnp.bfloat16)
    loc3 = jax.random.normal(k4, (N3, loc_planes), dtype=jnp.float32).astype(jnp.bfloat16)
    out3 = jax.block_until_ready(
        dynamic_mlp_a(img3, loc3, params, inplanes=inplanes, planes=planes))
    ref3 = reference(img3, loc3, params, inplanes=inplanes, planes=planes)
    np.testing.assert_allclose(np.asarray(out3, dtype=np.float32), np.asarray(ref3),
                               rtol=5e-2, atol=5e-2)

    print("KERNEL_OK")
</pallas_src>

<mosaic_0001>
module attributes {stable_mosaic.version = 11 : i64} {
  func.func @_dynamic_mlp_a_kernel(%arg0: i32, %arg1: memref<8x8xf32, #tpu.memory_space<vmem>>, %arg2: memref<8x16xf32, #tpu.memory_space<vmem>>, %arg3: memref<144x32xf32, #tpu.memory_space<vmem>>, %arg4: memref<1x32xf32, #tpu.memory_space<vmem>>, %arg5: memref<1x32xf32, #tpu.memory_space<vmem>>, %arg6: memref<8x32xf32, #tpu.memory_space<vmem>>) attributes {dimension_semantics = [#tpu.dimension_semantics<parallel>], iteration_bounds = array<i64: 2>, scalar_prefetch = 0 : i64, scratch_operands = 0 : i64, tpu.core_type = #tpu.core_type<tc>, window_params = [{transform_indices = @transform_0, window_bounds = array<i64: 8, 8>}, {transform_indices = @transform_1, window_bounds = array<i64: 8, 16>}, {pipeline_mode = #tpu.pipeline_mode<synchronous>, transform_indices = @transform_2, window_bounds = array<i64: 144, 32>}, {pipeline_mode = #tpu.pipeline_mode<synchronous>, transform_indices = @transform_3, window_bounds = array<i64: 1, 32>}, {pipeline_mode = #tpu.pipeline_mode<synchronous>, transform_indices = @transform_4, window_bounds = array<i64: 1, 32>}, {transform_indices = @transform_5, window_bounds = array<i64: 8, 32>}]} {
    %c0 = arith.constant 0 : index
    %c0_0 = arith.constant 0 : index
    %0 = vector.load %arg1[%c0, %c0_0] : memref<8x8xf32, #tpu.memory_space<vmem>>, vector<8x8xf32>
    %c0_1 = arith.constant 0 : index
    %c0_2 = arith.constant 0 : index
    %1 = vector.load %arg2[%c0_1, %c0_2] : memref<8x16xf32, #tpu.memory_space<vmem>>, vector<8x16xf32>
    %c128 = arith.constant 128 : index
    %c0_3 = arith.constant 0 : index
    %2 = vector.load %arg3[%c128, %c0_3] : memref<144x32xf32, #tpu.memory_space<vmem>>, vector<16x32xf32>
    %cst = arith.constant dense<0.000000e+00> : vector<8x32xf32>
    %3 = tpu.matmul %1, %2, %cst {dimension_numbers = #tpu.dot_dimension_numbers<[1], [0], [0], [1], [0, 0, 1, 1], [], []>} : vector<8x16xf32>, vector<16x32xf32>, vector<8x32xf32> -> vector<8x32xf32>
    %4 = vector.extract_strided_slice %0 {offsets = [0, 0], sizes = [8, 1], strides = [1, 1]} : vector<8x8xf32> to vector<8x1xf32>
    %5 = vector.broadcast %4 : vector<8x1xf32> to vector<8x16xf32>
    %6 = arith.mulf %5, %1 : vector<8x16xf32>
    %c0_4 = arith.constant 0 : index
    %c0_5 = arith.constant 0 : index
    %7 = vector.load %arg3[%c0_4, %c0_5] : memref<144x32xf32, #tpu.memory_space<vmem>>, vector<16x32xf32>
    %cst_6 = arith.constant dense<0.000000e+00> : vector<8x32xf32>
    %8 = tpu.matmul %6, %7, %cst_6 {dimension_numbers = #tpu.dot_dimension_numbers<[1], [0], [0], [1], [0, 0, 1, 1], [], []>} : vector<8x16xf32>, vector<16x32xf32>, vector<8x32xf32> -> vector<8x32xf32>
    %9 = arith.addf %3, %8 : vector<8x32xf32>
    %10 = vector.extract_strided_slice %0 {offsets = [0, 1], sizes = [8, 1], strides = [1, 1]} : vector<8x8xf32> to vector<8x1xf32>
    %11 = vector.broadcast %10 : vector<8x1xf32> to vector<8x16xf32>
    %12 = arith.mulf %11, %1 : vector<8x16xf32>
    %c16 = arith.constant 16 : index
    %c0_7 = arith.constant 0 : index
    %13 = vector.load %arg3[%c16, %c0_7] : memref<144x32xf32, #tpu.memory_space<vmem>>, vector<16x32xf32>
    %cst_8 = arith.constant dense<0.000000e+00> : vector<8x32xf32>
    %14 = tpu.matmul %12, %13, %cst_8 {dimension_numbers = #tpu.dot_dimension_numbers<[1], [0], [0], [1], [0, 0, 1, 1], [], []>} : vector<8x16xf32>, vector<16x32xf32>, vector<8x32xf32> -> vector<8x32xf32>
    %15 = arith.addf %9, %14 : vector<8x32xf32>
    %16 = vector.extract_strided_slice %0 {offsets = [0, 2], sizes = [8, 1], strides = [1, 1]} : vector<8x8xf32> to vector<8x1xf32>
    %17 = vector.broadcast %16 : vector<8x1xf32> to vector<8x16xf32>
    %18 = arith.mulf %17, %1 : vector<8x16xf32>
    %c32 = arith.constant 32 : index
    %c0_9 = arith.constant 0 : index
    %19 = vector.load %arg3[%c32, %c0_9] : memref<144x32xf32, #tpu.memory_space<vmem>>, vector<16x32xf32>
    %cst_10 = arith.constant dense<0.000000e+00> : vector<8x32xf32>
    %20 = tpu.matmul %18, %19, %cst_10 {dimension_numbers = #tpu.dot_dimension_numbers<[1], [0], [0], [1], [0, 0, 1, 1], [], []>} : vector<8x16xf32>, vector<16x32xf32>, vector<8x32xf32> -> vector<8x32xf32>
    %21 = arith.addf %15, %20 : vector<8x32xf32>
    %22 = vector.extract_strided_slice %0 {offsets = [0, 3], sizes = [8, 1], strides = [1, 1]} : vector<8x8xf32> to vector<8x1xf32>
    %23 = vector.broadcast %22 : vector<8x1xf32> to vector<8x16xf32>
    %24 = arith.mulf %23, %1 : vector<8x16xf32>
    %c48 = arith.constant 48 : index
    %c0_11 = arith.constant 0 : index
    %25 = vector.load %arg3[%c48, %c0_11] : memref<144x32xf32, #tpu.memory_space<vmem>>, vector<16x32xf32>
    %cst_12 = arith.constant dense<0.000000e+00> : vector<8x32xf32>
    %26 = tpu.matmul %24, %25, %cst_12 {dimension_numbers = #tpu.dot_dimension_numbers<[1], [0], [0], [1], [0, 0, 1, 1], [], []>} : vector<8x16xf32>, vector<16x32xf32>, vector<8x32xf32> -> vector<8x32xf32>
    %27 = arith.addf %21, %26 : vector<8x32xf32>
    %28 = vector.extract_strided_slice %0 {offsets = [0, 4], sizes = [8, 1], strides = [1, 1]} : vector<8x8xf32> to vector<8x1xf32>
    %29 = vector.broadcast %28 : vector<8x1xf32> to vector<8x16xf32>
    %30 = arith.mulf %29, %1 : vector<8x16xf32>
    %c64 = arith.constant 64 : index
    %c0_13 = arith.constant 0 : index
    %31 = vector.load %arg3[%c64, %c0_13] : memref<144x32xf32, #tpu.memory_space<vmem>>, vector<16x32xf32>
    %cst_14 = arith.constant dense<0.000000e+00> : vector<8x32xf32>
    %32 = tpu.matmul %30, %31, %cst_14 {dimension_numbers = #tpu.dot_dimension_numbers<[1], [0], [0], [1], [0, 0, 1, 1], [], []>} : vector<8x16xf32>, vector<16x32xf32>, vector<8x32xf32> -> vector<8x32xf32>
    %33 = arith.addf %27, %32 : vector<8x32xf32>
    %34 = vector.extract_strided_slice %0 {offsets = [0, 5], sizes = [8, 1], strides = [1, 1]} : vector<8x8xf32> to vector<8x1xf32>
    %35 = vector.broadcast %34 : vector<8x1xf32> to vector<8x16xf32>
    %36 = arith.mulf %35, %1 : vector<8x16xf32>
    %c80 = arith.constant 80 : index
    %c0_15 = arith.constant 0 : index
    %37 = vector.load %arg3[%c80, %c0_15] : memref<144x32xf32, #tpu.memory_space<vmem>>, vector<16x32xf32>
    %cst_16 = arith.constant dense<0.000000e+00> : vector<8x32xf32>
    %38 = tpu.matmul %36, %37, %cst_16 {dimension_numbers = #tpu.dot_dimension_numbers<[1], [0], [0], [1], [0, 0, 1, 1], [], []>} : vector<8x16xf32>, vector<16x32xf32>, vector<8x32xf32> -> vector<8x32xf32>
    %39 = arith.addf %33, %38 : vector<8x32xf32>
    %40 = vector.extract_strided_slice %0 {offsets = [0, 6], sizes = [8, 1], strides = [1, 1]} : vector<8x8xf32> to vector<8x1xf32>
    %41 = vector.broadcast %40 : vector<8x1xf32> to vector<8x16xf32>
    %42 = arith.mulf %41, %1 : vector<8x16xf32>
    %c96 = arith.constant 96 : index
    %c0_17 = arith.constant 0 : index
    %43 = vector.load %arg3[%c96, %c0_17] : memref<144x32xf32, #tpu.memory_space<vmem>>, vector<16x32xf32>
    %cst_18 = arith.constant dense<0.000000e+00> : vector<8x32xf32>
    %44 = tpu.matmul %42, %43, %cst_18 {dimension_numbers = #tpu.dot_dimension_numbers<[1], [0], [0], [1], [0, 0, 1, 1], [], []>} : vector<8x16xf32>, vector<16x32xf32>, vector<8x32xf32> -> vector<8x32xf32>
    %45 = arith.addf %39, %44 : vector<8x32xf32>
    %46 = vector.extract_strided_slice %0 {offsets = [0, 7], sizes = [8, 1], strides = [1, 1]} : vector<8x8xf32> to vector<8x1xf32>
    %47 = vector.broadcast %46 : vector<8x1xf32> to vector<8x16xf32>
    %48 = arith.mulf %47, %1 : vector<8x16xf32>
    %c112 = arith.constant 112 : index
    %c0_19 = arith.constant 0 : index
    %49 = vector.load %arg3[%c112, %c0_19] : memref<144x32xf32, #tpu.memory_space<vmem>>, vector<16x32xf32>
    %cst_20 = arith.constant dense<0.000000e+00> : vector<8x32xf32>
    %50 = tpu.matmul %48, %49, %cst_20 {dimension_numbers = #tpu.dot_dimension_numbers<[1], [0], [0], [1], [0, 0, 1, 1], [], []>} : vector<8x16xf32>, vector<16x32xf32>, vector<8x32xf32> -> vector<8x32xf32>
    %51 = arith.addf %45, %50 : vector<8x32xf32>
    %cst_21 = arith.constant dense<0.000000e+00> : vector<8xf32>
    %52 = vector.multi_reduction <add>, %51, %cst_21 [1] : vector<8x32xf32> to vector<8xf32>
    %53 = vector.shape_cast %52 : vector<8xf32> to vector<8x1xf32>
    %cst_22 = arith.constant 3.200000e+01 : f32
    %54 = vector.broadcast %cst_22 : f32 to vector<8x1xf32>
    %55 = arith.divf %53, %54 : vector<8x1xf32>
    %56 = arith.mulf %51, %51 : vector<8x32xf32>
    %cst_23 = arith.constant dense<0.000000e+00> : vector<8xf32>
    %57 = vector.multi_reduction <add>, %56, %cst_23 [1] : vector<8x32xf32> to vector<8xf32>
    %58 = vector.shape_cast %57 : vector<8xf32> to vector<8x1xf32>
    %cst_24 = arith.constant 3.200000e+01 : f32
    %59 = vector.broadcast %cst_24 : f32 to vector<8x1xf32>
    %60 = arith.divf %58, %59 : vector<8x1xf32>
    %61 = arith.mulf %55, %55 : vector<8x1xf32>
    %62 = arith.subf %60, %61 : vector<8x1xf32>
    %63 = vector.broadcast %55 : vector<8x1xf32> to vector<8x32xf32>
    %64 = arith.subf %51, %63 : vector<8x32xf32>
    %cst_25 = arith.constant 9.99999974E-6 : f32
    %65 = vector.broadcast %cst_25 : f32 to vector<8x1xf32>
    %66 = arith.addf %62, %65 : vector<8x1xf32>
    %67 = math.rsqrt %66 : vector<8x1xf32>
    %68 = vector.broadcast %67 : vector<8x1xf32> to vector<8x32xf32>
    %69 = arith.mulf %64, %68 : vector<8x32xf32>
    %c0_26 = arith.constant 0 : index
    %c0_27 = arith.constant 0 : index
    %70 = vector.load %arg4[%c0_26, %c0_27] : memref<1x32xf32, #tpu.memory_space<vmem>>, vector<1x32xf32>
    %71 = vector.broadcast %70 : vector<1x32xf32> to vector<8x32xf32>
    %72 = arith.mulf %69, %71 : vector<8x32xf32>
    %c0_28 = arith.constant 0 : index
    %c0_29 = arith.constant 0 : index
    %73 = vector.load %arg5[%c0_28, %c0_29] : memref<1x32xf32, #tpu.memory_space<vmem>>, vector<1x32xf32>
    %74 = vector.broadcast %73 : vector<1x32xf32> to vector<8x32xf32>
    %75 = arith.addf %72, %74 : vector<8x32xf32>
    %cst_30 = arith.constant 0.000000e+00 : f32
    %76 = vector.broadcast %cst_30 : f32 to vector<8x32xf32>
    %77 = arith.maximumf %75, %76 : vector<8x32xf32>
    %c0_31 = arith.constant 0 : index
    %c0_32 = arith.constant 0 : index
    %78 = vector.load %arg6[%c0_31, %c0_32] : memref<8x32xf32, #tpu.memory_space<vmem>>, vector<8x32xf32>
    tpu.vector_store %arg6[%c0_31, %c0_32], %77 {strides = array<i32>} : memref<8x32xf32, #tpu.memory_space<vmem>>, vector<8x32xf32>,
    return
  }
  func.func @transform_0(%arg0: i32) -> (i32, i32) {
    %c0_i32 = arith.constant 0 : i32
    %c0_i32_0 = arith.constant 0 : i32
    return %arg0, %c0_i32 : i32, i32
  }
  func.func @transform_1(%arg0: i32) -> (i32, i32) {
    %c0_i32 = arith.constant 0 : i32
    %c0_i32_0 = arith.constant 0 : i32
    return %arg0, %c0_i32 : i32, i32
  }
  func.func @transform_2(%arg0: i32) -> (i32, i32) {
    %c0_i32 = arith.constant 0 : i32
    %c0_i32_0 = arith.constant 0 : i32
    %c0_i32_1 = arith.constant 0 : i32
    return %c0_i32, %c0_i32_0 : i32, i32
  }
  func.func @transform_3(%arg0: i32) -> (i32, i32) {
    %c0_i32 = arith.constant 0 : i32
    %c0_i32_0 = arith.constant 0 : i32
    %c0_i32_1 = arith.constant 0 : i32
    return %c0_i32, %c0_i32_0 : i32, i32
  }
  func.func @transform_4(%arg0: i32) -> (i32, i32) {
    %c0_i32 = arith.constant 0 : i32
    %c0_i32_0 = arith.constant 0 : i32
    %c0_i32_1 = arith.constant 0 : i32
    return %c0_i32, %c0_i32_0 : i32, i32
  }
  func.func @transform_5(%arg0: i32) -> (i32, i32) {
    %c0_i32 = arith.constant 0 : i32
    %c0_i32_0 = arith.constant 0 : i32
    return %arg0, %c0_i32 : i32, i32
  }
}

</mosaic_0001>

<llo_original>
// kernel: tpu_custom_call.1
$region0: #{tpu_custom_call.1}
  #allocation0 [shape = 'u32[]', space=smem, size = 0x4, offset = 0x4, fixed_abs, tag = 'smem constant byte address 0x4 - core index']
  #allocation1 [shape = 'u32[144,128]{1,0:T(1,128)}', space=vmem, size = 0x12000, scoped, tag = 'internal scratch']
  %s0 = inlined_call_operand.vmem [shape: f32[16,8], index: 0, kind: input, shape index: {}]
  %s1 = inlined_call_operand.vmem [shape: f32[16,16], index: 1, kind: input, shape index: {}]
  %s2 = inlined_call_operand.vmem [shape: f32[144,32], index: 2, kind: input, shape index: {}]
  %s3 = inlined_call_operand.vmem [shape: f32[1,32], index: 3, kind: input, shape index: {}]
  %s4 = inlined_call_operand.vmem [shape: f32[1,32], index: 4, kind: input, shape index: {}]
  %s5 = inlined_call_operand.hbm [shape: f32[16,32], index: 5, kind: output, shape index: {}]
  %s6 = sld [smem:[#allocation0]]
  $region53: #{tpu_custom_call.1} parent=0
    _
  %s8 = ssub.s32 1, %s6
  %s9 = scalar_select 0, %s8, %s6
  $region1: #{tpu_custom_call.1} parent=0
    #allocation2 [shape = 'u8[8192]{0}', space=vmem, size = 0x2000, scoped, tag = 'output window, operand 0']
    #allocation3 [shape = 's32[2]{0}', space=sflag, size = 0x8, scoped, tag = 'scoped memory for tpu_custom_call.1']
    %10 = vsyncpa [#allocation3], 0
    %s11 = scalar_lea.sflag [#allocation3], 1
    %12 = vsyncpa %s11, 0
    loop: start=0, step=1, limit=4
    $region2: #{tpu_custom_call.1} parent=1 // loop_pre_header
      _
    $region3: #{tpu_custom_call.1} parent=1 // loop_header
      %s14 = sphi 0, %s18
      %p15 = scmp.ge.s32.totalorder %s14, 4
      %s24 = sphi 0, %s26
      %s27 = sphi 0, %s24
      %s28 = sphi 0, %s27
      %s44 = sphi 0, %s28
      %s50 = sphi 0, %s52
      %s53 = sphi 0, %s50
      %s54 = sphi 0, %s53
      %s70 = sphi 0, %s54
      %s74 = sphi 0, %s74
      %s76 = sphi 0, %s74
      %s77 = sphi 0, %s76
      %s91 = sphi 0, %s77
      %s95 = sphi 0, %s95
      %s97 = sphi 0, %s95
      %s98 = sphi 0, %s97
      %s112 = sphi 0, %s98
      %s116 = sphi 0, %s116
      %s118 = sphi 0, %s116
      %s119 = sphi 0, %s118
      %s133 = sphi 0, %s119
      %s139 = sphi 0, %s141
      %s142 = sphi 0, %s139
      %s143 = sphi 0, %s142
      %s159 = sphi 0, %s143
    $region4: #{tpu_custom_call.1} parent=1 // loop_header_branch
      %17 = sbr.rel (%p15) target = $region8
    $region5: #{tpu_custom_call.1} parent=1 // loop_body
      %s19 = ssub.s32 %s14, 1
      %s20 = ssub.s32 %s14, 2
      %s21 = sadd.s32 %s14, 1
      %s22 = ssub.s32 %s14, %s21
      %p23 = scmp.eq.s32.totalorder %s22, 0
      %s25 = sadd.s32 %s24, 1
      %s26 = scalar_select %p23, %s24, %s25
      %p29 = pneg %p23
      %p30 = scmp.eq.s32.totalorder %s14, 1
      %p31 = por %p29, %p30
      %p32 = scmp.ne.s32.totalorder %s24, %s27
      %p33 = scmp.eq.s32.totalorder %s14, 0
      %p34 = por %p32, %p33
      %p35 = scmp.ne.s32.totalorder %s24, %s27
      %p36 = scmp.eq.s32.totalorder %s19, 1
      %p37 = por %p35, %p36
      %p38 = scmp.ne.s32.totalorder %s27, %s28
      %p39 = scmp.eq.s32.totalorder %s19, 0
      %p40 = por %p38, %p39
      %p41 = scmp.ne.s32.totalorder %s27, %s28
      %p42 = scmp.eq.s32.totalorder %s20, 1
      %p43 = por %p41, %p42
      %p45 = scmp.ne.s32.totalorder %s28, %s44
      %p46 = scmp.eq.s32.totalorder %s20, 0
      %p47 = por %p45, %p46
      %s48 = ssub.s32 %s14, %s21
      %p49 = scmp.eq.s32.totalorder %s48, 0
      %s51 = sadd.s32 %s50, 1
      %s52 = scalar_select %p49, %s50, %s51
      %p55 = pneg %p49
      %p56 = scmp.eq.s32.totalorder %s14, 1
      %p57 = por %p55, %p56
      %p58 = scmp.ne.s32.totalorder %s50, %s53
      %p59 = scmp.eq.s32.totalorder %s14, 0
      %p60 = por %p58, %p59
      %p61 = scmp.ne.s32.totalorder %s50, %s53
      %p62 = scmp.eq.s32.totalorder %s19, 1
      %p63 = por %p61, %p62
      %p64 = scmp.ne.s32.totalorder %s53, %s54
      %p65 = scmp.eq.s32.totalorder %s19, 0
      %p66 = por %p64, %p65
      %p67 = scmp.ne.s32.totalorder %s53, %s54
      %p68 = scmp.eq.s32.totalorder %s20, 1
      %p69 = por %p67, %p68
      %p71 = scmp.ne.s32.totalorder %s54, %s70
      %p72 = scmp.eq.s32.totalorder %s20, 0
      %p73 = por %p71, %p72
      %s75 = sadd.s32 %s74, 1
      %p78 = scmp.eq.s32.totalorder %s14, 1
      %p79 = scmp.ne.s32.totalorder %s74, %s76
      %p80 = scmp.eq.s32.totalorder %s14, 0
      %p81 = por %p79, %p80
      %p82 = scmp.ne.s32.totalorder %s74, %s76
      %p83 = scmp.eq.s32.totalorder %s19, 1
      %p84 = por %p82, %p83
      %p85 = scmp.ne.s32.totalorder %s76, %s77
      %p86 = scmp.eq.s32.totalorder %s19, 0
      %p87 = por %p85, %p86
      %p88 = scmp.ne.s32.totalorder %s76, %s77
      %p89 = scmp.eq.s32.totalorder %s20, 1
      %p90 = por %p88, %p89
      %p92 = scmp.ne.s32.totalorder %s77, %s91
      %p93 = scmp.eq.s32.totalorder %s20, 0
      %p94 = por %p92, %p93
      %s96 = sadd.s32 %s95, 1
      %p99 = scmp.eq.s32.totalorder %s14, 1
      %p100 = scmp.ne.s32.totalorder %s95, %s97
      %p101 = scmp.eq.s32.totalorder %s14, 0
      %p102 = por %p100, %p101
      %p103 = scmp.ne.s32.totalorder %s95, %s97
      %p104 = scmp.eq.s32.totalorder %s19, 1
      %p105 = por %p103, %p104
      %p106 = scmp.ne.s32.totalorder %s97, %s98
      %p107 = scmp.eq.s32.totalorder %s19, 0
      %p108 = por %p106, %p107
      %p109 = scmp.ne.s32.totalorder %s97, %s98
      %p110 = scmp.eq.s32.totalorder %s20, 1
      %p111 = por %p109, %p110
      %p113 = scmp.ne.s32.totalorder %s98, %s112
      %p114 = scmp.eq.s32.totalorder %s20, 0
      %p115 = por %p113, %p114
      %s117 = sadd.s32 %s116, 1
      %p120 = scmp.eq.s32.totalorder %s14, 1
      %p121 = scmp.ne.s32.totalorder %s116, %s118
      %p122 = scmp.eq.s32.totalorder %s14, 0
      %p123 = por %p121, %p122
      %p124 = scmp.ne.s32.totalorder %s116, %s118
      %p125 = scmp.eq.s32.totalorder %s19, 1
      %p126 = por %p124, %p125
      %p127 = scmp.ne.s32.totalorder %s118, %s119
      %p128 = scmp.eq.s32.totalorder %s19, 0
      %p129 = por %p127, %p128
      %p130 = scmp.ne.s32.totalorder %s118, %s119
      %p131 = scmp.eq.s32.totalorder %s20, 1
      %p132 = por %p130, %p131
      %p134 = scmp.ne.s32.totalorder %s119, %s133
      %p135 = scmp.eq.s32.totalorder %s20, 0
      %p136 = por %p134, %p135
      %s137 = ssub.s32 %s14, %s21
      %p138 = scmp.eq.s32.totalorder %s137, 0
      %s140 = sadd.s32 %s139, 1
      %s141 = scalar_select %p138, %s139, %s140
      %p144 = pneg %p138
      %p145 = scmp.eq.s32.totalorder %s14, 1
      %p146 = por %p144, %p145
      %p147 = scmp.ne.s32.totalorder %s139, %s142
      %p148 = scmp.eq.s32.totalorder %s14, 0
      %p149 = por %p147, %p148
      %p150 = scmp.ne.s32.totalorder %s139, %s142
      %p151 = scmp.eq.s32.totalorder %s19, 1
      %p152 = por %p150, %p151
      %p153 = scmp.ne.s32.totalorder %s142, %s143
      %p154 = scmp.eq.s32.totalorder %s19, 0
      %p155 = por %p153, %p154
      %p156 = scmp.ne.s32.totalorder %s142, %s143
      %p157 = scmp.eq.s32.totalorder %s20, 1
      %p158 = por %p156, %p157
      %p160 = scmp.ne.s32.totalorder %s143, %s159
      %p161 = scmp.eq.s32.totalorder %s20, 0
      %p162 = por %p160, %p161
      %p163 = scmp.le.s32.totalorder 1, %s14
      %p164 = scmp.lt.s32.totalorder %s14, 3
      %p165 = pnand %p163, %p164
      %p166 = pneg %p165
      // Predicated region
      $region9: #{tpu_custom_call.1} parent=5 // pred_check
        _
      $region10: #{tpu_custom_call.1} parent=5 // pred_check_branch
        %168 = sbr.rel (%p165) target = $region12
      $region11: #{tpu_custom_call.1} parent=5 // pred_region
        %s169 = ssub.s32 %s14, 1
        // Predicated region
        $region13: #{tpu_custom_call.1} parent=11 // pred_check
          %p170 = pneg %p87
        $region14: #{tpu_custom_call.1} parent=11 // pred_check_branch
          %172 = sbr.rel (%p170) target = $region16
        $region15: #{tpu_custom_call.1} parent=11 // pred_region
          _
        $region16: #{tpu_custom_call.1} parent=11 // pred_fallthru
          _
        // Predicated region
        $region17: #{tpu_custom_call.1} parent=11 // pred_check
          %p173 = pneg %p108
        $region18: #{tpu_custom_call.1} parent=11 // pred_check_branch
          %175 = sbr.rel (%p173) target = $region20
        $region19: #{tpu_custom_call.1} parent=11 // pred_region
          _
        $region20: #{tpu_custom_call.1} parent=11 // pred_fallthru
          _
        // Predicated region
        $region21: #{tpu_custom_call.1} parent=11 // pred_check
          %p176 = pneg %p129
        $region22: #{tpu_custom_call.1} parent=11 // pred_check_branch
          %178 = sbr.rel (%p176) target = $region24
        $region23: #{tpu_custom_call.1} parent=11 // pred_region
          _
        $region24: #{tpu_custom_call.1} parent=11 // pred_fallthru
          _
      $region12: #{tpu_custom_call.1} parent=5 // pred_fallthru
        _
      %p179 = scmp.lt.s32.totalorder %s14, 2
      // Predicated region
      $region25: #{tpu_custom_call.1} parent=5 // pred_check
        %p180 = pneg %p179
      $region26: #{tpu_custom_call.1} parent=5 // pred_check_branch
        %182 = sbr.rel (%p180) target = $region28
      $region27: #{tpu_custom_call.1} parent=5 // pred_region
        // Predicated region
        $region29: #{tpu_custom_call.1} parent=27 // pred_check
          %p183 = pneg %p34
        $region30: #{tpu_custom_call.1} parent=27 // pred_check_branch
          %185 = sbr.rel (%p183) target = $region32
        $region31: #{tpu_custom_call.1} parent=27 // pred_region
          %p186 = scmp.lt.s32.totalorder %s14, 1
          %s187 = scalar_select %p186, %s14, 1
          %s188 = smul.addr %s187, 8
          %s189 = scalar_lea.vmem %s0, %s188
        $region32: #{tpu_custom_call.1} parent=27 // pred_fallthru
          _
        // Predicated region
        $region33: #{tpu_custom_call.1} parent=27 // pred_check
          %p190 = pneg %p60
        $region34: #{tpu_custom_call.1} parent=27 // pred_check_branch
          %192 = sbr.rel (%p190) target = $region36
        $region35: #{tpu_custom_call.1} parent=27 // pred_region
          %p193 = scmp.lt.s32.totalorder %s14, 1
          %s194 = scalar_select %p193, %s14, 1
          %s195 = smul.addr %s194, 8
          %s196 = scalar_lea.vmem %s1, %s195
        $region36: #{tpu_custom_call.1} parent=27 // pred_fallthru
          _
      $region28: #{tpu_custom_call.1} parent=5 // pred_fallthru
        _
      %p197 = scmp.le.s32.totalorder 1, %s14
      %p198 = scmp.lt.s32.totalorder %s14, 3
      %p199 = pnand %p197, %p198
      %p200 = pneg %p199
      // Predicated region
      $region37: #{tpu_custom_call.1} parent=5 // pred_check
        _
      $region38: #{tpu_custom_call.1} parent=5 // pred_check_branch
        %202 = sbr.rel (%p199) target = $region40
      $region39: #{tpu_custom_call.1} parent=5 // pred_region
        %s203 = ssub.s32 %s14, 1
        %p204 = scmp.lt.s32.totalorder %s19, 1
        %s205 = scalar_select %p204, %s19, 1
        %s206 = smul.addr %s205, 8
        %s207 = scalar_lea.vmem %s0, %s206
        %p208 = pneg %p40
        %p209 = pneg %p37
        %p210 = scmp.lt.s32.totalorder %s19, 1
        %s211 = scalar_select %p210, %s19, 1
        %s212 = smul.addr %s211, 8
        %s213 = scalar_lea.vmem %s1, %s212
        %p214 = pneg %p66
        %p215 = pneg %p63
        %p216 = pneg %p87
        %p217 = pneg %p84
        %p218 = pneg %p108
        %p219 = pneg %p105
        %p220 = pneg %p129
        %p221 = pneg %p126
        %p222 = pneg %p155
        %p223 = pneg %p152
        %s224 = sand.u32 %s142, 1
        %s225 = scalar_lea.sflag [#allocation3], %s224
        %s226 = sand.u32 %s142, 1
        %s227 = smul.addr %s226, 8
        %s228 = scalar_lea.vmem [#allocation2], %s227
        %p229 = scmp.lt.s32.totalorder %s19, 1
        %s230 = scalar_select %p229, %s19, 1
        %s231 = smul.addr %s230, 8
        %s232 = scalar_lea.vmem %s0, %s231
        %p233 = scmp.lt.s32.totalorder %s19, 1
        %s234 = scalar_select %p233, %s19, 1
        %s235 = smul.addr %s234, 8
        %s236 = scalar_lea.vmem %s1, %s235
        %v237 = vld [vmem:[%s232] sm:$0xff]
        %v238 = vld [vmem:[%s236] sm:$0xff]
        %v239 = vld [vmem:[%s2 + $0x80] sm:$0xff]
        %v240 = vld [vmem:[%s2 + $0x88] sm:$0xff]
        %242 = vset.pattern.permute.xlu0 0
        %243 = vperm.xlu0 %242, %v237
        %v244 = vpop.permute.xlu0 %243
        %v246 = vmul.f32 %v244, %v238
        %v247 = vld [vmem:[%s2] sm:$0xff]
        %v248 = vld [vmem:[%s2 + $0x8] sm:$0xff]
        %vm249 = vcmask 130048
        %v251 = vsel %vm249, %v246, 0
        %253 = vmatprep.subr.mxu0 0.0
        %254 = vmatpush1.msra.mxu0 %v247
        %255 = vmatprep.subr.mxu0 0.0
        %256 = vmatpush1.msra.mxu0 %v248
        %257 = vmatprep.subr.mxu0 0.0
        %258 = vmatpush1.msra.mxu0 0.0
        %259 = vmatprep.subr.mxu0 0.0
        %260 = vmatpush1.msra.mxu0 0.0
        %261 = vmatprep.subr.mxu0 0.0
        %262 = vmatpush1.msra.mxu0 0.0
        %263 = vmatprep.subr.mxu0 0.0
        %264 = vmatpush1.msra.mxu0 0.0
        %265 = vmatprep.subr.mxu0 0.0
        %266 = vmatpush1.msra.mxu0 0.0
        %267 = vmatprep.subr.mxu0 0.0
        %268 = vmatpush1.msra.mxu0 0.0
        %269 = vmatprep.subr.mxu0 0.0
        %270 = vmatpush1.msra.mxu0 0.0
        %271 = vmatprep.subr.mxu0 0.0
        %272 = vmatpush1.msra.mxu0 0.0
        %273 = vmatprep.subr.mxu0 0.0
        %274 = vmatpush1.msra.mxu0 0.0
        %275 = vmatprep.subr.mxu0 0.0
        %276 = vmatpush1.msra.mxu0 0.0
        %277 = vmatprep.subr.mxu0 0.0
        %278 = vmatpush1.msra.mxu0 0.0
        %279 = vmatprep.subr.mxu0 0.0
        %280 = vmatpush1.msra.mxu0 0.0
        %281 = vmatprep.subr.mxu0 0.0
        %282 = vmatpush1.msra.mxu0 0.0
        %283 = vmatprep.subr.mxu0 0.0
        %284 = vmatpush1.msra.mxu0 0.0
        %285 = vmatprep.subr.mxu0 0.0
        %286 = vmatpush1.msra.mxu0 0.0
        %287 = vmatprep.subr.mxu0 0.0
        %288 = vmatpush1.msra.mxu0 0.0
        %289 = vmatprep.subr.mxu0 0.0
        %290 = vmatpush1.msra.mxu0 0.0
        %291 = vmatprep.subr.mxu0 0.0
        %292 = vmatpush1.msra.mxu0 0.0
        %293 = vmatprep.subr.mxu0 0.0
        %294 = vmatpush1.msra.mxu0 0.0
        %295 = vmatprep.subr.mxu0 0.0
        %296 = vmatpush1.msra.mxu0 0.0
        %297 = vmatprep.subr.mxu0 0.0
        %298 = vmatpush1.msra.mxu0 0.0
        %299 = vmatprep.subr.mxu0 0.0
        %300 = vmatpush1.msra.mxu0 0.0
        %301 = vmatprep.subr.mxu0 0.0
        %302 = vmatpush1.msra.mxu0 0.0
        %303 = vmatprep.subr.mxu0 0.0
        %304 = vmatpush1.msra.mxu0 0.0
        %305 = vmatprep.subr.mxu0 0.0
        %306 = vmatpush1.msra.mxu0 0.0
        %307 = vmatprep.subr.mxu0 0.0
        %308 = vmatpush1.msra.mxu0 0.0
        %309 = vmatprep.subr.mxu0 0.0
        %310 = vmatpush1.msra.mxu0 0.0
        %311 = vmatprep.subr.mxu0 0.0
        %312 = vmatpush1.msra.mxu0 0.0
        %313 = vmatprep.subr.mxu0 0.0
        %314 = vmatpush1.msra.mxu0 0.0
        %315 = vmatprep.subr.mxu0 0.0
        %316 = vmatpush1.msra.mxu0 0.0
        %317 = vmatprep.mubr.f32.mxu0 0.0
        %318 = vmatmul.mubr.f32.gmra.mrb[0].mxu0 %v251
        %v319 = vpop.f32.mrb[0].mxu0
        %v320 = vadd.f32 0.0, %v319
        %v321 = vpop.f32.mrb[0].mxu0
        %322 = vdwg.mxu0
        %v324 = vsel %vm249, %v238, 0
        %326 = vmatprep.subr.mxu0 0.0
        %327 = vmatpush1.msra.mxu0 %v239
        %328 = vmatprep.subr.mxu0 0.0
        %329 = vmatpush1.msra.mxu0 %v240
        %330 = vmatprep.subr.mxu0 0.0
        %331 = vmatpush1.msra.mxu0 0.0
        %332 = vmatprep.subr.mxu0 0.0
        %333 = vmatpush1.msra.mxu0 0.0
        %334 = vmatprep.subr.mxu0 0.0
        %335 = vmatpush1.msra.mxu0 0.0
        %336 = vmatprep.subr.mxu0 0.0
        %337 = vmatpush1.msra.mxu0 0.0
        %338 = vmatprep.subr.mxu0 0.0
        %339 = vmatpush1.msra.mxu0 0.0
        %340 = vmatprep.subr.mxu0 0.0
        %341 = vmatpush1.msra.mxu0 0.0
        %342 = vmatprep.subr.mxu0 0.0
        %343 = vmatpush1.msra.mxu0 0.0
        %344 = vmatprep.subr.mxu0 0.0
        %345 = vmatpush1.msra.mxu0 0.0
        %346 = vmatprep.subr.mxu0 0.0
        %347 = vmatpush1.msra.mxu0 0.0
        %348 = vmatprep.subr.mxu0 0.0
        %349 = vmatpush1.msra.mxu0 0.0
        %350 = vmatprep.subr.mxu0 0.0
        %351 = vmatpush1.msra.mxu0 0.0
        %352 = vmatprep.subr.mxu0 0.0
        %353 = vmatpush1.msra.mxu0 0.0
        %354 = vmatprep.subr.mxu0 0.0
        %355 = vmatpush1.msra.mxu0 0.0
        %356 = vmatprep.subr.mxu0 0.0
        %357 = vmatpush1.msra.mxu0 0.0
        %358 = vmatprep.subr.mxu0 0.0
        %359 = vmatpush1.msra.mxu0 0.0
        %360 = vmatprep.subr.mxu0 0.0
        %361 = vmatpush1.msra.mxu0 0.0
        %362 = vmatprep.subr.mxu0 0.0
        %363 = vmatpush1.msra.mxu0 0.0
        %364 = vmatprep.subr.mxu0 0.0
        %365 = vmatpush1.msra.mxu0 0.0
        %366 = vmatprep.subr.mxu0 0.0
        %367 = vmatpush1.msra.mxu0 0.0
        %368 = vmatprep.subr.mxu0 0.0
        %369 = vmatpush1.msra.mxu0 0.0
        %370 = vmatprep.subr.mxu0 0.0
        %371 = vmatpush1.msra.mxu0 0.0
        %372 = vmatprep.subr.mxu0 0.0
        %373 = vmatpush1.msra.mxu0 0.0
        %374 = vmatprep.subr.mxu0 0.0
        %375 = vmatpush1.msra.mxu0 0.0
        %376 = vmatprep.subr.mxu0 0.0
        %377 = vmatpush1.msra.mxu0 0.0
        %378 = vmatprep.subr.mxu0 0.0
        %379 = vmatpush1.msra.mxu0 0.0
        %380 = vmatprep.subr.mxu0 0.0
        %381 = vmatpush1.msra.mxu0 0.0
        %382 = vmatprep.subr.mxu0 0.0
        %383 = vmatpush1.msra.mxu0 0.0
        %384 = vmatprep.subr.mxu0 0.0
        %385 = vmatpush1.msra.mxu0 0.0
        %386 = vmatprep.subr.mxu0 0.0
        %387 = vmatpush1.msra.mxu0 0.0
        %388 = vmatprep.subr.mxu0 0.0
        %389 = vmatpush1.msra.mxu0 0.0
        %390 = vmatprep.mubr.f32.mxu0 0.0
        %391 = vmatmul.mubr.f32.gmra.mrb[0].mxu0 %v324
        %v392 = vpop.f32.mrb[0].mxu0
        %v393 = vadd.f32 %v320, %v392
        %v394 = vpop.f32.mrb[0].mxu0
        %395 = vdwg.mxu0
        %396 = vset.pattern.permute.xlu0 1
        %397 = vperm.xlu0 %396, %v237
        %v398 = vpop.permute.xlu0 %397
        %v400 = vmul.f32 %v398, %v238
        %v401 = vld [vmem:[%s2 + $0x10] sm:$0xff]
        %v402 = vld [vmem:[%s2 + $0x18] sm:$0xff]
        %v404 = vsel %vm249, %v400, 0
        %406 = vmatprep.subr.mxu0 0.0
        %407 = vmatpush1.msra.mxu0 %v401
        %408 = vmatprep.subr.mxu0 0.0
        %409 = vmatpush1.msra.mxu0 %v402
        %410 = vmatprep.subr.mxu0 0.0
        %411 = vmatpush1.msra.mxu0 0.0
        %412 = vmatprep.subr.mxu0 0.0
        %413 = vmatpush1.msra.mxu0 0.0
        %414 = vmatprep.subr.mxu0 0.0
        %415 = vmatpush1.msra.mxu0 0.0
        %416 = vmatprep.subr.mxu0 0.0
        %417 = vmatpush1.msra.mxu0 0.0
        %418 = vmatprep.subr.mxu0 0.0
        %419 = vmatpush1.msra.mxu0 0.0
        %420 = vmatprep.subr.mxu0 0.0
        %421 = vmatpush1.msra.mxu0 0.0
        %422 = vmatprep.subr.mxu0 0.0
        %423 = vmatpush1.msra.mxu0 0.0
        %424 = vmatprep.subr.mxu0 0.0
        %425 = vmatpush1.msra.mxu0 0.0
        %426 = vmatprep.subr.mxu0 0.0
        %427 = vmatpush1.msra.mxu0 0.0
        %428 = vmatprep.subr.mxu0 0.0
        %429 = vmatpush1.msra.mxu0 0.0
        %430 = vmatprep.subr.mxu0 0.0
        %431 = vmatpush1.msra.mxu0 0.0
        %432 = vmatprep.subr.mxu0 0.0
        %433 = vmatpush1.msra.mxu0 0.0
        %434 = vmatprep.subr.mxu0 0.0
        %435 = vmatpush1.msra.mxu0 0.0
        %436 = vmatprep.subr.mxu0 0.0
        %437 = vmatpush1.msra.mxu0 0.0
        %438 = vmatprep.subr.mxu0 0.0
        %439 = vmatpush1.msra.mxu0 0.0
        %440 = vmatprep.subr.mxu0 0.0
        %441 = vmatpush1.msra.mxu0 0.0
        %442 = vmatprep.subr.mxu0 0.0
        %443 = vmatpush1.msra.mxu0 0.0
        %444 = vmatprep.subr.mxu0 0.0
        %445 = vmatpush1.msra.mxu0 0.0
        %446 = vmatprep.subr.mxu0 0.0
        %447 = vmatpush1.msra.mxu0 0.0
        %448 = vmatprep.subr.mxu0 0.0
        %449 = vmatpush1.msra.mxu0 0.0
        %450 = vmatprep.subr.mxu0 0.0
        %451 = vmatpush1.msra.mxu0 0.0
        %452 = vmatprep.subr.mxu0 0.0
        %453 = vmatpush1.msra.mxu0 0.0
        %454 = vmatprep.subr.mxu0 0.0
        %455 = vmatpush1.msra.mxu0 0.0
        %456 = vmatprep.subr.mxu0 0.0
        %457 = vmatpush1.msra.mxu0 0.0
        %458 = vmatprep.subr.mxu0 0.0
        %459 = vmatpush1.msra.mxu0 0.0
        %460 = vmatprep.subr.mxu0 0.0
        %461 = vmatpush1.msra.mxu0 0.0
        %462 = vmatprep.subr.mxu0 0.0
        %463 = vmatpush1.msra.mxu0 0.0
        %464 = vmatprep.subr.mxu0 0.0
        %465 = vmatpush1.msra.mxu0 0.0
        %466 = vmatprep.subr.mxu0 0.0
        %467 = vmatpush1.msra.mxu0 0.0
        %468 = vmatprep.subr.mxu0 0.0
        %469 = vmatpush1.msra.mxu0 0.0
        %470 = vmatprep.mubr.f32.mxu0 0.0
        %471 = vmatmul.mubr.f32.gmra.mrb[0].mxu0 %v404
        %v472 = vpop.f32.mrb[0].mxu0
        %v473 = vadd.f32 0.0, %v472
        %v474 = vpop.f32.mrb[0].mxu0
        %475 = vdwg.mxu0
        %v476 = vadd.f32 %v393, %v473
        %477 = vset.pattern.permute.xlu0 2
        %478 = vperm.xlu0 %477, %v237
        %v479 = vpop.permute.xlu0 %478
        %v481 = vmul.f32 %v479, %v238
        %v482 = vld [vmem:[%s2 + $0x20] sm:$0xff]
        %v483 = vld [vmem:[%s2 + $0x28] sm:$0xff]
        %v485 = vsel %vm249, %v481, 0
        %487 = vmatprep.subr.mxu0 0.0
        %488 = vmatpush1.msra.mxu0 %v482
        %489 = vmatprep.subr.mxu0 0.0
        %490 = vmatpush1.msra.mxu0 %v483
        %491 = vmatprep.subr.mxu0 0.0
        %492 = vmatpush1.msra.mxu0 0.0
        %493 = vmatprep.subr.mxu0 0.0
        %494 = vmatpush1.msra.mxu0 0.0
        %495 = vmatprep.subr.mxu0 0.0
        %496 = vmatpush1.msra.mxu0 0.0
        %497 = vmatprep.subr.mxu0 0.0
        %498 = vmatpush1.msra.mxu0 0.0
        %499 = vmatprep.subr.mxu0 0.0
        %500 = vmatpush1.msra.mxu0 0.0
        %501 = vmatprep.subr.mxu0 0.0
        %502 = vmatpush1.msra.mxu0 0.0
        %503 = vmatprep.subr.mxu0 0.0
        %504 = vmatpush1.msra.mxu0 0.0
        %505 = vmatprep.subr.mxu0 0.0
        %506 = vmatpush1.msra.mxu0 0.0
        %507 = vmatprep.subr.mxu0 0.0
        %508 = vmatpush1.msra.mxu0 0.0
        %509 = vmatprep.subr.mxu0 0.0
        %510 = vmatpush1.msra.mxu0 0.0
        %511 = vmatprep.subr.mxu0 0.0
        %512 = vmatpush1.msra.mxu0 0.0
        %513 = vmatprep.subr.mxu0 0.0
        %514 = vmatpush1.msra.mxu0 0.0
        %515 = vmatprep.subr.mxu0 0.0
        %516 = vmatpush1.msra.mxu0 0.0
        %517 = vmatprep.subr.mxu0 0.0
        %518 = vmatpush1.msra.mxu0 0.0
        %519 = vmatprep.subr.mxu0 0.0
        %520 = vmatpush1.msra.mxu0 0.0
        %521 = vmatprep.subr.mxu0 0.0
        %522 = vmatpush1.msra.mxu0 0.0
        %523 = vmatprep.subr.mxu0 0.0
        %524 = vmatpush1.msra.mxu0 0.0
        %525 = vmatprep.subr.mxu0 0.0
        %526 = vmatpush1.msra.mxu0 0.0
        %527 = vmatprep.subr.mxu0 0.0
        %528 = vmatpush1.msra.mxu0 0.0
        %529 = vmatprep.subr.mxu0 0.0
        %530 = vmatpush1.msra.mxu0 0.0
        %531 = vmatprep.subr.mxu0 0.0
        %532 = vmatpush1.msra.mxu0 0.0
        %533 = vmatprep.subr.mxu0 0.0
        %534 = vmatpush1.msra.mxu0 0.0
        %535 = vmatprep.subr.mxu0 0.0
        %536 = vmatpush1.msra.mxu0 0.0
        %537 = vmatprep.subr.mxu0 0.0
        %538 = vmatpush1.msra.mxu0 0.0
        %539 = vmatprep.subr.mxu0 0.0
        %540 = vmatpush1.msra.mxu0 0.0
        %541 = vmatprep.subr.mxu0 0.0
        %542 = vmatpush1.msra.mxu0 0.0
        %543 = vmatprep.subr.mxu0 0.0
        %544 = vmatpush1.msra.mxu0 0.0
        %545 = vmatprep.subr.mxu0 0.0
        %546 = vmatpush1.msra.mxu0 0.0
        %547 = vmatprep.subr.mxu0 0.0
        %548 = vmatpush1.msra.mxu0 0.0
        %549 = vmatprep.subr.mxu0 0.0
        %550 = vmatpush1.msra.mxu0 0.0
        %551 = vmatprep.mubr.f32.mxu0 0.0
        %552 = vmatmul.mubr.f32.gmra.mrb[0].mxu0 %v485
        %v553 = vpop.f32.mrb[0].mxu0
        %v554 = vadd.f32 0.0, %v553
        %v555 = vpop.f32.mrb[0].mxu0
        %556 = vdwg.mxu0
        %v557 = vadd.f32 %v476, %v554
        %558 = vset.pattern.permute.xlu0 3
        %559 = vperm.xlu0 %558, %v237
        %v560 = vpop.permute.xlu0 %559
        %v562 = vmul.f32 %v560, %v238
        %v563 = vld [vmem:[%s2 + $0x30] sm:$0xff]
        %v564 = vld [vmem:[%s2 + $0x38] sm:$0xff]
        %v566 = vsel %vm249, %v562, 0
        %568 = vmatprep.subr.mxu0 0.0
        %569 = vmatpush1.msra.mxu0 %v563
        %570 = vmatprep.subr.mxu0 0.0
        %571 = vmatpush1.msra.mxu0 %v564
        %572 = vmatprep.subr.mxu0 0.0
        %573 = vmatpush1.msra.mxu0 0.0
        %574 = vmatprep.subr.mxu0 0.0
        %575 = vmatpush1.msra.mxu0 0.0
        %576 = vmatprep.subr.mxu0 0.0
        %577 = vmatpush1.msra.mxu0 0.0
        %578 = vmatprep.subr.mxu0 0.0
        %579 = vmatpush1.msra.mxu0 0.0
        %580 = vmatprep.subr.mxu0 0.0
        %581 = vmatpush1.msra.mxu0 0.0
        %582 = vmatprep.subr.mxu0 0.0
        %583 = vmatpush1.msra.mxu0 0.0
        %584 = vmatprep.subr.mxu0 0.0
        %585 = vmatpush1.msra.mxu0 0.0
        %586 = vmatprep.subr.mxu0 0.0
        %587 = vmatpush1.msra.mxu0 0.0
        %588 = vmatprep.subr.mxu0 0.0
        %589 = vmatpush1.msra.mxu0 0.0
        %590 = vmatprep.subr.mxu0 0.0
        %591 = vmatpush1.msra.mxu0 0.0
        %592 = vmatprep.subr.mxu0 0.0
        %593 = vmatpush1.msra.mxu0 0.0
        %594 = vmatprep.subr.mxu0 0.0
        %595 = vmatpush1.msra.mxu0 0.0
        %596 = vmatprep.subr.mxu0 0.0
        %597 = vmatpush1.msra.mxu0 0.0
        %598 = vmatprep.subr.mxu0 0.0
        %599 = vmatpush1.msra.mxu0 0.0
        %600 = vmatprep.subr.mxu0 0.0
        %601 = vmatpush1.msra.mxu0 0.0
        %602 = vmatprep.subr.mxu0 0.0
        %603 = vmatpush1.msra.mxu0 0.0
        %604 = vmatprep.subr.mxu0 0.0
        %605 = vmatpush1.msra.mxu0 0.0
        %606 = vmatprep.subr.mxu0 0.0
        %607 = vmatpush1.msra.mxu0 0.0
        %608 = vmatprep.subr.mxu0 0.0
        %609 = vmatpush1.msra.mxu0 0.0
        %610 = vmatprep.subr.mxu0 0.0
        %611 = vmatpush1.msra.mxu0 0.0
        %612 = vmatprep.subr.mxu0 0.0
        %613 = vmatpush1.msra.mxu0 0.0
        %614 = vmatprep.subr.mxu0 0.0
        %615 = vmatpush1.msra.mxu0 0.0
        %616 = vmatprep.subr.mxu0 0.0
        %617 = vmatpush1.msra.mxu0 0.0
        %618 = vmatprep.subr.mxu0 0.0
        %619 = vmatpush1.msra.mxu0 0.0
        %620 = vmatprep.subr.mxu0 0.0
        %621 = vmatpush1.msra.mxu0 0.0
        %622 = vmatprep.subr.mxu0 0.0
        %623 = vmatpush1.msra.mxu0 0.0
        %624 = vmatprep.subr.mxu0 0.0
        %625 = vmatpush1.msra.mxu0 0.0
        %626 = vmatprep.subr.mxu0 0.0
        %627 = vmatpush1.msra.mxu0 0.0
        %628 = vmatprep.subr.mxu0 0.0
        %629 = vmatpush1.msra.mxu0 0.0
        %630 = vmatprep.subr.mxu0 0.0
        %631 = vmatpush1.msra.mxu0 0.0
        %632 = vmatprep.mubr.f32.mxu0 0.0
        %633 = vmatmul.mubr.f32.gmra.mrb[0].mxu0 %v566
        %v634 = vpop.f32.mrb[0].mxu0
        %v635 = vadd.f32 0.0, %v634
        %v636 = vpop.f32.mrb[0].mxu0
        %637 = vdwg.mxu0
        %v638 = vadd.f32 %v557, %v635
        %639 = vset.pattern.permute.xlu0 4
        %640 = vperm.xlu0 %639, %v237
        %v641 = vpop.permute.xlu0 %640
        %v643 = vmul.f32 %v641, %v238
        %v644 = vld [vmem:[%s2 + $0x40] sm:$0xff]
        %v645 = vld [vmem:[%s2 + $0x48] sm:$0xff]
        %v647 = vsel %vm249, %v643, 0
        %649 = vmatprep.subr.mxu0 0.0
        %650 = vmatpush1.msra.mxu0 %v644
        %651 = vmatprep.subr.mxu0 0.0
        %652 = vmatpush1.msra.mxu0 %v645
        %653 = vmatprep.subr.mxu0 0.0
        %654 = vmatpush1.msra.mxu0 0.0
        %655 = vmatprep.subr.mxu0 0.0
        %656 = vmatpush1.msra.mxu0 0.0
        %657 = vmatprep.subr.mxu0 0.0
        %658 = vmatpush1.msra.mxu0 0.0
        %659 = vmatprep.subr.mxu0 0.0
        %660 = vmatpush1.msra.mxu0 0.0
        %661 = vmatprep.subr.mxu0 0.0
        %662 = vmatpush1.msra.mxu0 0.0
        %663 = vmatprep.subr.mxu0 0.0
        %664 = vmatpush1.msra.mxu0 0.0
        %665 = vmatprep.subr.mxu0 0.0
        %666 = vmatpush1.msra.mxu0 0.0
        %667 = vmatprep.subr.mxu0 0.0
        %668 = vmatpush1.msra.mxu0 0.0
        %669 = vmatprep.subr.mxu0 0.0
        %670 = vmatpush1.msra.mxu0 0.0
        %671 = vmatprep.subr.mxu0 0.0
        %672 = vmatpush1.msra.mxu0 0.0
        %673 = vmatprep.subr.mxu0 0.0
        %674 = vmatpush1.msra.mxu0 0.0
        %675 = vmatprep.subr.mxu0 0.0
        %676 = vmatpush1.msra.mxu0 0.0
        %677 = vmatprep.subr.mxu0 0.0
        %678 = vmatpush1.msra.mxu0 0.0
        %679 = vmatprep.subr.mxu0 0.0
        %680 = vmatpush1.msra.mxu0 0.0
        %681 = vmatprep.subr.mxu0 0.0
        %682 = vmatpush1.msra.mxu0 0.0
        %683 = vmatprep.subr.mxu0 0.0
        %684 = vmatpush1.msra.mxu0 0.0
        %685 = vmatprep.subr.mxu0 0.0
        %686 = vmatpush1.msra.mxu0 0.0
        %687 = vmatprep.subr.mxu0 0.0
        %688 = vmatpush1.msra.mxu0 0.0
        %689 = vmatprep.subr.mxu0 0.0
        %690 = vmatpush1.msra.mxu0 0.0
        %691 = vmatprep.subr.mxu0 0.0
        %692 = vmatpush1.msra.mxu0 0.0
        %693 = vmatprep.subr.mxu0 0.0
        %694 = vmatpush1.msra.mxu0 0.0
        %695 = vmatprep.subr.mxu0 0.0
        %696 = vmatpush1.msra.mxu0 0.0
        %697 = vmatprep.subr.mxu0 0.0
        %698 = vmatpush1.msra.mxu0 0.0
        %699 = vmatprep.subr.mxu0 0.0
        %700 = vmatpush1.msra.mxu0 0.0
        %701 = vmatprep.subr.mxu0 0.0
        %702 = vmatpush1.msra.mxu0 0.0
        %703 = vmatprep.subr.mxu0 0.0
        %704 = vmatpush1.msra.mxu0 0.0
        %705 = vmatprep.subr.mxu0 0.0
        %706 = vmatpush1.msra.mxu0 0.0
        %707 = vmatprep.subr.mxu0 0.0
        %708 = vmatpush1.msra.mxu0 0.0
        %709 = vmatprep.subr.mxu0 0.0
        %710 = vmatpush1.msra.mxu0 0.0
        %711 = vmatprep.subr.mxu0 0.0
        %712 = vmatpush1.msra.mxu0 0.0
        %713 = vmatprep.mubr.f32.mxu0 0.0
        %714 = vmatmul.mubr.f32.gmra.mrb[0].mxu0 %v647
        %v715 = vpop.f32.mrb[0].mxu0
        %v716 = vadd.f32 0.0, %v715
        %v717 = vpop.f32.mrb[0].mxu0
        %718 = vdwg.mxu0
        %v719 = vadd.f32 %v638, %v716
        %720 = vset.pattern.permute.xlu0 5
        %721 = vperm.xlu0 %720, %v237
        %v722 = vpop.permute.xlu0 %721
        %v724 = vmul.f32 %v722, %v238
        %v725 = vld [vmem:[%s2 + $0x50] sm:$0xff]
        %v726 = vld [vmem:[%s2 + $0x58] sm:$0xff]
        %v728 = vsel %vm249, %v724, 0
        %730 = vmatprep.subr.mxu0 0.0
        %731 = vmatpush1.msra.mxu0 %v725
        %732 = vmatprep.subr.mxu0 0.0
        %733 = vmatpush1.msra.mxu0 %v726
        %734 = vmatprep.subr.mxu0 0.0
        %735 = vmatpush1.msra.mxu0 0.0
        %736 = vmatprep.subr.mxu0 0.0
        %737 = vmatpush1.msra.mxu0 0.0
        %738 = vmatprep.subr.mxu0 0.0
        %739 = vmatpush1.msra.mxu0 0.0
        %740 = vmatprep.subr.mxu0 0.0
        %741 = vmatpush1.msra.mxu0 0.0
        %742 = vmatprep.subr.mxu0 0.0
        %743 = vmatpush1.msra.mxu0 0.0
        %744 = vmatprep.subr.mxu0 0.0
        %745 = vmatpush1.msra.mxu0 0.0
        %746 = vmatprep.subr.mxu0 0.0
        %747 = vmatpush1.msra.mxu0 0.0
        %748 = vmatprep.subr.mxu0 0.0
        %749 = vmatpush1.msra.mxu0 0.0
        %750 = vmatprep.subr.mxu0 0.0
        %751 = vmatpush1.msra.mxu0 0.0
        %752 = vmatprep.subr.mxu0 0.0
        %753 = vmatpush1.msra.mxu0 0.0
        %754 = vmatprep.subr.mxu0 0.0
        %755 = vmatpush1.msra.mxu0 0.0
        %756 = vmatprep.subr.mxu0 0.0
        %757 = vmatpush1.msra.mxu0 0.0
        %758 = vmatprep.subr.mxu0 0.0
        %759 = vmatpush1.msra.mxu0 0.0
        %760 = vmatprep.subr.mxu0 0.0
        %761 = vmatpush1.msra.mxu0 0.0
        %762 = vmatprep.subr.mxu0 0.0
        %763 = vmatpush1.msra.mxu0 0.0
        %764 = vmatprep.subr.mxu0 0.0
        %765 = vmatpush1.msra.mxu0 0.0
        %766 = vmatprep.subr.mxu0 0.0
        %767 = vmatpush1.msra.mxu0 0.0
        %768 = vmatprep.subr.mxu0 0.0
        %769 = vmatpush1.msra.mxu0 0.0
        %770 = vmatprep.subr.mxu0 0.0
        %771 = vmatpush1.msra.mxu0 0.0
        %772 = vmatprep.subr.mxu0 0.0
        %773 = vmatpush1.msra.mxu0 0.0
        %774 = vmatprep.subr.mxu0 0.0
        %775 = vmatpush1.msra.mxu0 0.0
        %776 = vmatprep.subr.mxu0 0.0
        %777 = vmatpush1.msra.mxu0 0.0
        %778 = vmatprep.subr.mxu0 0.0
        %779 = vmatpush1.msra.mxu0 0.0
        %780 = vmatprep.subr.mxu0 0.0
        %781 = vmatpush1.msra.mxu0 0.0
        %782 = vmatprep.subr.mxu0 0.0
        %783 = vmatpush1.msra.mxu0 0.0
        %784 = vmatprep.subr.mxu0 0.0
        %785 = vmatpush1.msra.mxu0 0.0
        %786 = vmatprep.subr.mxu0 0.0
        %787 = vmatpush1.msra.mxu0 0.0
        %788 = vmatprep.subr.mxu0 0.0
        %789 = vmatpush1.msra.mxu0 0.0
        %790 = vmatprep.subr.mxu0 0.0
        %791 = vmatpush1.msra.mxu0 0.0
        %792 = vmatprep.subr.mxu0 0.0
        %793 = vmatpush1.msra.mxu0 0.0
        %794 = vmatprep.mubr.f32.mxu0 0.0
        %795 = vmatmul.mubr.f32.gmra.mrb[0].mxu0 %v728
        %v796 = vpop.f32.mrb[0].mxu0
        %v797 = vadd.f32 0.0, %v796
        %v798 = vpop.f32.mrb[0].mxu0
        %799 = vdwg.mxu0
        %v800 = vadd.f32 %v719, %v797
        %801 = vset.pattern.permute.xlu0 6
        %802 = vperm.xlu0 %801, %v237
        %v803 = vpop.permute.xlu0 %802
        %v805 = vmul.f32 %v803, %v238
        %v806 = vld [vmem:[%s2 + $0x60] sm:$0xff]
        %v807 = vld [vmem:[%s2 + $0x68] sm:$0xff]
        %v809 = vsel %vm249, %v805, 0
        %811 = vmatprep.subr.mxu0 0.0
        %812 = vmatpush1.msra.mxu0 %v806
        %813 = vmatprep.subr.mxu0 0.0
        %814 = vmatpush1.msra.mxu0 %v807
        %815 = vmatprep.subr.mxu0 0.0
        %816 = vmatpush1.msra.mxu0 0.0
        %817 = vmatprep.subr.mxu0 0.0
        %818 = vmatpush1.msra.mxu0 0.0
        %819 = vmatprep.subr.mxu0 0.0
        %820 = vmatpush1.msra.mxu0 0.0
        %821 = vmatprep.subr.mxu0 0.0
        %822 = vmatpush1.msra.mxu0 0.0
        %823 = vmatprep.subr.mxu0 0.0
        %824 = vmatpush1.msra.mxu0 0.0
        %825 = vmatprep.subr.mxu0 0.0
        %826 = vmatpush1.msra.mxu0 0.0
        %827 = vmatprep.subr.mxu0 0.0
        %828 = vmatpush1.msra.mxu0 0.0
        %829 = vmatprep.subr.mxu0 0.0
        %830 = vmatpush1.msra.mxu0 0.0
        %831 = vmatprep.subr.mxu0 0.0
        %832 = vmatpush1.msra.mxu0 0.0
        %833 = vmatprep.subr.mxu0 0.0
        %834 = vmatpush1.msra.mxu0 0.0
        %835 = vmatprep.subr.mxu0 0.0
        %836 = vmatpush1.msra.mxu0 0.0
        %837 = vmatprep.subr.mxu0 0.0
        %838 = vmatpush1.msra.mxu0 0.0
        %839 = vmatprep.subr.mxu0 0.0
        %840 = vmatpush1.msra.mxu0 0.0
        %841 = vmatprep.subr.mxu0 0.0
        %842 = vmatpush1.msra.mxu0 0.0
        %843 = vmatprep.subr.mxu0 0.0
        %844 = vmatpush1.msra.mxu0 0.0
        %845 = vmatprep.subr.mxu0 0.0
        %846 = vmatpush1.msra.mxu0 0.0
        %847 = vmatprep.subr.mxu0 0.0
        %848 = vmatpush1.msra.mxu0 0.0
        %849 = vmatprep.subr.mxu0 0.0
        %850 = vmatpush1.msra.mxu0 0.0
        %851 = vmatprep.subr.mxu0 0.0
        %852 = vmatpush1.msra.mxu0 0.0
        %853 = vmatprep.subr.mxu0 0.0
        %854 = vmatpush1.msra.mxu0 0.0
        %855 = vmatprep.subr.mxu0 0.0
        %856 = vmatpush1.msra.mxu0 0.0
        %857 = vmatprep.subr.mxu0 0.0
        %858 = vmatpush1.msra.mxu0 0.0
        %859 = vmatprep.subr.mxu0 0.0
        %860 = vmatpush1.msra.mxu0 0.0
        %861 = vmatprep.subr.mxu0 0.0
        %862 = vmatpush1.msra.mxu0 0.0
        %863 = vmatprep.subr.mxu0 0.0
        %864 = vmatpush1.msra.mxu0 0.0
        %865 = vmatprep.subr.mxu0 0.0
        %866 = vmatpush1.msra.mxu0 0.0
        %867 = vmatprep.subr.mxu0 0.0
        %868 = vmatpush1.msra.mxu0 0.0
        %869 = vmatprep.subr.mxu0 0.0
        %870 = vmatpush1.msra.mxu0 0.0
        %871 = vmatprep.subr.mxu0 0.0
        %872 = vmatpush1.msra.mxu0 0.0
        %873 = vmatprep.subr.mxu0 0.0
        %874 = vmatpush1.msra.mxu0 0.0
        %875 = vmatprep.mubr.f32.mxu0 0.0
        %876 = vmatmul.mubr.f32.gmra.mrb[0].mxu0 %v809
        %v877 = vpop.f32.mrb[0].mxu0
        %v878 = vadd.f32 0.0, %v877
        %v879 = vpop.f32.mrb[0].mxu0
        %880 = vdwg.mxu0
        %v881 = vadd.f32 %v800, %v878
        %882 = vset.pattern.permute.xlu0 7
        %883 = vperm.xlu0 %882, %v237
        %v884 = vpop.permute.xlu0 %883
        %v886 = vmul.f32 %v884, %v238
        %v887 = vld [vmem:[%s2 + $0x70] sm:$0xff]
        %v888 = vld [vmem:[%s2 + $0x78] sm:$0xff]
        %v890 = vsel %vm249, %v886, 0
        %892 = vmatprep.subr.mxu0 0.0
        %893 = vmatpush1.msra.mxu0 %v887
        %894 = vmatprep.subr.mxu0 0.0
        %895 = vmatpush1.msra.mxu0 %v888
        %896 = vmatprep.subr.mxu0 0.0
        %897 = vmatpush1.msra.mxu0 0.0
        %898 = vmatprep.subr.mxu0 0.0
        %899 = vmatpush1.msra.mxu0 0.0
        %900 = vmatprep.subr.mxu0 0.0
        %901 = vmatpush1.msra.mxu0 0.0
        %902 = vmatprep.subr.mxu0 0.0
        %903 = vmatpush1.msra.mxu0 0.0
        %904 = vmatprep.subr.mxu0 0.0
        %905 = vmatpush1.msra.mxu0 0.0
        %906 = vmatprep.subr.mxu0 0.0
        %907 = vmatpush1.msra.mxu0 0.0
        %908 = vmatprep.subr.mxu0 0.0
        %909 = vmatpush1.msra.mxu0 0.0
        %910 = vmatprep.subr.mxu0 0.0
        %911 = vmatpush1.msra.mxu0 0.0
        %912 = vmatprep.subr.mxu0 0.0
        %913 = vmatpush1.msra.mxu0 0.0
        %914 = vmatprep.subr.mxu0 0.0
        %915 = vmatpush1.msra.mxu0 0.0
        %916 = vmatprep.subr.mxu0 0.0
        %917 = vmatpush1.msra.mxu0 0.0
        %918 = vmatprep.subr.mxu0 0.0
        %919 = vmatpush1.msra.mxu0 0.0
        %920 = vmatprep.subr.mxu0 0.0
        %921 = vmatpush1.msra.mxu0 0.0
        %922 = vmatprep.subr.mxu0 0.0
        %923 = vmatpush1.msra.mxu0 0.0
        %924 = vmatprep.subr.mxu0 0.0
        %925 = vmatpush1.msra.mxu0 0.0
        %926 = vmatprep.subr.mxu0 0.0
        %927 = vmatpush1.msra.mxu0 0.0
        %928 = vmatprep.subr.mxu0 0.0
        %929 = vmatpush1.msra.mxu0 0.0
        %930 = vmatprep.subr.mxu0 0.0
        %931 = vmatpush1.msra.mxu0 0.0
        %932 = vmatprep.subr.mxu0 0.0
        %933 = vmatpush1.msra.mxu0 0.0
        %934 = vmatprep.subr.mxu0 0.0
        %935 = vmatpush1.msra.mxu0 0.0
        %936 = vmatprep.subr.mxu0 0.0
        %937 = vmatpush1.msra.mxu0 0.0
        %938 = vmatprep.subr.mxu0 0.0
        %939 = vmatpush1.msra.mxu0 0.0
        %940 = vmatprep.subr.mxu0 0.0
        %941 = vmatpush1.msra.mxu0 0.0
        %942 = vmatprep.subr.mxu0 0.0
        %943 = vmatpush1.msra.mxu0 0.0
        %944 = vmatprep.subr.mxu0 0.0
        %945 = vmatpush1.msra.mxu0 0.0
        %946 = vmatprep.subr.mxu0 0.0
        %947 = vmatpush1.msra.mxu0 0.0
        %948 = vmatprep.subr.mxu0 0.0
        %949 = vmatpush1.msra.mxu0 0.0
        %950 = vmatprep.subr.mxu0 0.0
        %951 = vmatpush1.msra.mxu0 0.0
        %952 = vmatprep.subr.mxu0 0.0
        %953 = vmatpush1.msra.mxu0 0.0
        %954 = vmatprep.subr.mxu0 0.0
        %955 = vmatpush1.msra.mxu0 0.0
        %956 = vmatprep.mubr.f32.mxu0 0.0
        %957 = vmatmul.mubr.f32.gmra.mrb[0].mxu0 %v890
        %v958 = vpop.f32.mrb[0].mxu0
        %v959 = vadd.f32 0.0, %v958
        %v960 = vpop.f32.mrb[0].mxu0
        %961 = vdwg.mxu0
        %v962 = vadd.f32 %v881, %v959
        %vm963 = vcmask 261120
        %v964 = vsel %vm963, %v962, 0.0
        %965 = vadd.xlane.f32.xlu0 %v964
        %v966 = vpop.xlane.xlu0 %965
        %v967 = vrcp.pop 32.0
        %v968 = vmul.f32 %v966, %v967
        %v969 = vmul.f32 %v962, %v962
        %v970 = vsel %vm963, %v969, 0.0
        %971 = vadd.xlane.f32.xlu0 %v970
        %v972 = vpop.xlane.xlu0 %971
        %v973 = vmul.f32 %v972, %v967
        %v974 = vmul.f32 %v968, %v968
        %v975 = vsub.f32 %v973, %v974
        %v976 = vsub.f32 %v962, %v968
        %v977 = vadd.f32 %v975, 1e-05
        %v978 = vrsqrt.pop %v977
        %v979 = vmul.f32 %v976, %v978
        %v980 = vld [vmem:[%s3] sm:$0x1]
        %v982 = vlaneseq
        %v983 = vshrl.u32 %v982, 7
        %v984 = vsub.s32 0, %v983
        %v985 = vrot.slane %v980, %v984
        %v987 = vmul.f32 %v979, %v985
        %v988 = vld [vmem:[%s4] sm:$0x1]
        %v990 = vlaneseq
        %v991 = vshrl.u32 %v990, 7
        %v992 = vsub.s32 0, %v991
        %v993 = vrot.slane %v988, %v992
        %v995 = vadd.f32 %v987, %v993
        %v996 = vmax.f32 %v995, 0.0
        %997 = vst.msk [vmem:[%s228] sm:$0xff] %vm963, %v996
        %s998 = sand.u32 %s142, 1
        %s999 = scalar_lea.sflag [#allocation3], %s998
        %s1000 = sand.u32 %s142, 1
        %s1001 = smul.addr %s1000, 8
        %s1002 = scalar_lea.vmem [#allocation2], %s1001
        // Predicated region
        $region41: #{tpu_custom_call.1} parent=39 // pred_check
          %p1003 = pneg %p152
        $region42: #{tpu_custom_call.1} parent=39 // pred_check_branch
          %1005 = sbr.rel (%p1003) target = $region44
        $region43: #{tpu_custom_call.1} parent=39 // pred_region
          %s1007 = ssub.s32 128, 128
          %1008 = vsyncadd %s999, %s1007
          %s1009 = smul.addr %s19, 128
          %s1010 = scalar_lea.hbm %s5, %s1009
          %s1012 = sshll.u32 %s1002, 4
          %s1013 = int_to_ptr.vmem [resolvable:$true] %s1012
          %1015 = dma.vmem_to_hbm [thread:$0]  %s1013, 128, %s1010, %s999
        $region44: #{tpu_custom_call.1} parent=39 // pred_fallthru
          _
      $region40: #{tpu_custom_call.1} parent=5 // pred_fallthru
        _
      %p1016 = scmp.le.s32.totalorder 2, %s14
      // Predicated region
      $region45: #{tpu_custom_call.1} parent=5 // pred_check
        %p1017 = pneg %p1016
      $region46: #{tpu_custom_call.1} parent=5 // pred_check_branch
        %1019 = sbr.rel (%p1017) target = $region48
      $region47: #{tpu_custom_call.1} parent=5 // pred_region
        %s1020 = ssub.s32 %s14, 2
        // Predicated region
        $region49: #{tpu_custom_call.1} parent=47 // pred_check
          %p1021 = pneg %p158
        $region50: #{tpu_custom_call.1} parent=47 // pred_check_branch
          %1023 = sbr.rel (%p1021) target = $region52
        $region51: #{tpu_custom_call.1} parent=47 // pred_region
          %s1024 = sand.u32 %s143, 1
          %s1025 = scalar_lea.sflag [#allocation3], %s1024
          %s1026 = sand.u32 %s143, 1
          %s1027 = smul.addr %s1026, 8
          %s1028 = scalar_lea.vmem [#allocation2], %s1027
          %1029 = dma.done %s1025, 128
        $region52: #{tpu_custom_call.1} parent=47 // pred_fallthru
          _
      $region48: #{tpu_custom_call.1} parent=5 // pred_fallthru
        _
    $region6: #{tpu_custom_call.1} parent=1 // loop_footer
      %s18 = sadd.s32 1, %s14
    $region7: #{tpu_custom_call.1} parent=1 // loop_footer_branch
      %13 = sbr.rel target = $region3
    $region8: #{tpu_custom_call.1} parent=1 // loop_exit
      _
    %1030 = vsyncpa [#allocation3], 1
    %s1031 = scalar_lea.sflag [#allocation3], 1
    %1032 = vsyncpa %s1031, 1

</llo_original>
